<compile_context>
chip_gen: v5e
topology: v5e:2x2
jax: 0.10.0
libtpu: 0.0.40
codegen_flags: <defaults>
</compile_context>

<pallas_src>
import functools

import jax
import jax.numpy as jnp
from jax.experimental import pallas as pl
from jax.experimental.pallas import tpu as pltpu


def _round_up(x, m):
    return (x + m - 1) // m * m


def mha_kernel(x_ref, wq_ref, bq_ref, wkv_ref, bkv_ref, wo_ref, bo_ref,
               o_ref, kv_scr, q_scr, *, heads, head_size, q_tile, dmodel,
               seq_len, seq_pad, compute_dtype):
    """One grid step == (batch element b, query tile qi).

    x_ref   : (1, S_pad, D)         padded input sequence (compute dtype)
    wq_ref  : (D, D)                Q weights with 1/sqrt(hs) folded in
    bq_ref  : (1, D)                scaled Q bias (f32)
    wkv_ref : (D, 2*D)              fused [K|V] projection weights
    bkv_ref : (1, 2*D)              fused [K|V] bias (f32)
    wo_ref  : (heads, hs, D)        head-major output-projection weights
    bo_ref  : (1, D)                output-projection bias (f32)
    o_ref   : (1, q_tile, D)        lane-dense output block
    kv_scr  : (2*heads, S_pad, hs)  head-major K|V cache (persistent per b)
    q_scr   : (heads, q_tile, hs)   head-major Q for the current tile
    """
    qi = pl.program_id(1)
    hs = head_size
    cdt = compute_dtype

    # ---- once per batch element: K|V projection, written head-major --------
    @pl.when(qi == 0)
    def _():
        x_all = x_ref[0]                                           # (S_pad, D)
        kv = jnp.dot(x_all, wkv_ref[...],
                     preferred_element_type=jnp.float32) + bkv_ref[0]
        for j in range(2 * heads):                                 # static unroll
            kv_scr[j] = kv[:, j * hs:(j + 1) * hs].astype(cdt)

    # ---- Q projection for this query tile only ------------------------------
    row0 = pl.multiple_of(qi * q_tile, 8)
    x_tile = x_ref[0, pl.ds(row0, q_tile), :]                      # (q_tile, D)
    q = jnp.dot(x_tile, wq_ref[...],
                preferred_element_type=jnp.float32) + bq_ref[0]
    for h in range(heads):
        q_scr[h] = q[:, h * hs:(h + 1) * hs].astype(cdt)

    q_hm = q_scr[...]                                              # (H, q_tile, hs)
    k_hm = kv_scr[pl.ds(0, heads)]                                 # (H, S_pad, hs)
    v_hm = kv_scr[pl.ds(heads, heads)]                             # (H, S_pad, hs)

    # ---- scores + softmax, batched over heads --------------------------------
    s = jnp.einsum("hqd,hkd->hqk", q_hm, k_hm,
                   preferred_element_type=jnp.float32)             # (H, q_tile, S_pad)
    if seq_pad > seq_len:                                          # mask padded keys
        key_idx = jax.lax.broadcasted_iota(jnp.int32, (1, 1, seq_pad), 2)
        s = jnp.where(key_idx < seq_len, s, jnp.float32(-1e30))

    m = jnp.max(s, axis=-1, keepdims=True)
    e = jnp.exp(s - m)
    l = jnp.sum(e, axis=-1, keepdims=True)

    # TODO(synk): for very long S add an inner KV tile with an online
    # (flash-style) softmax so the (q_tile, S) score tile stays in registers.

    ctx = jnp.einsum("hqk,hkd->hqd", e.astype(cdt), v_hm,
                     preferred_element_type=jnp.float32)           # (H, q_tile, hs)
    ctx = (ctx / l).astype(cdt)                                    # exact normalization

    # ---- output projection: accumulate per head into a lane-dense slab ------
    y = jnp.zeros((q_tile, dmodel), jnp.float32)
    for h in range(heads):
        y = y + jnp.dot(ctx[h], wo_ref[h], preferred_element_type=jnp.float32)
    y = y + bo_ref[0]
    o_ref[0] = y.astype(o_ref.dtype)


def multi_head_attention(x, params, heads, *, q_tile=None,
                         compute_dtype=jnp.float32):
    """x: (B, S, D). params: dict of (in,out)-layout weights. Returns (B, S, D)."""
    B, S, D = x.shape
    hs = D // heads
    assert heads * hs == D, "dmodel must be divisible by heads"
    out_dtype = x.dtype
    cdt = jnp.dtype(compute_dtype)

    # Query tile / sequence padding (keeps blocks (8,128)-friendly).
    if q_tile is None:
        q_tile = 128 if S >= 128 else _round_up(S, 8)
    q_tile = max(8, _round_up(min(q_tile, _round_up(S, 8)), 8))
    s_pad = _round_up(S, q_tile)
    n_q = s_pad // q_tile

    # Host-side weight prep: fold 1/sqrt(hs) into Q, fuse K|V, reshape the
    # output projection head-major, cast weights to the compute dtype.
    scale = 1.0 / jnp.sqrt(jnp.float32(hs))
    wq = (params["wq"] * scale).astype(cdt)                             # (D, D)
    bq = (params["bq"] * scale).astype(jnp.float32)                     # (1, D)
    wkv = jnp.concatenate([params["wk"], params["wv"]], axis=1).astype(cdt)   # (D, 2D)
    bkv = jnp.concatenate([params["bk"], params["bv"]], axis=1).astype(jnp.float32)
    wo = params["wo"].reshape(heads, hs, D).astype(cdt)                 # head-major
    bo = params["bo"].astype(jnp.float32)

    x_in = x
    if s_pad != S:
        x_in = jnp.pad(x_in, ((0, 0), (0, s_pad - S), (0, 0)))
    x_in = x_in.astype(cdt)

    kernel = functools.partial(
        mha_kernel, heads=heads, head_size=hs, q_tile=q_tile, dmodel=D,
        seq_len=S, seq_pad=s_pad, compute_dtype=cdt)

    resident = pl.BlockSpec(memory_space=pltpu.MemorySpace.VMEM)   # whole array, single copy
    grid_spec = pltpu.PrefetchScalarGridSpec(
        num_scalar_prefetch=0,
        grid=(B, n_q),
        in_specs=[
            # x: full (padded) sequence of batch element b; block index is
            # constant across qi so it stays resident (no re-DMA per tile).
            pl.BlockSpec((1, s_pad, D), lambda b, qi: (b, 0, 0)),
            # Grid-invariant weights/biases: VMEM-resident, not pipelined.
            resident, resident, resident, resident, resident, resident,
        ],
        out_specs=pl.BlockSpec((1, q_tile, D), lambda b, qi: (b, qi, 0)),
        scratch_shapes=[
            pltpu.VMEM((2 * heads, s_pad, hs), cdt),   # head-major K|V cache
            pltpu.VMEM((heads, q_tile, hs), cdt),      # head-major Q tile
        ],
    )

    # VMEM budget (rough; includes lane padding of hs-wide slabs) + cost hint.
    csize = cdt.itemsize
    lane = lambda n: max(n, 128)
    est_vmem = (2 * s_pad * D * csize                      # x block (double-buffered)
                + 2 * q_tile * D * 4                       # out block (double-buffered)
                + 2 * heads * s_pad * lane(hs) * csize     # K|V cache
                + heads * q_tile * lane(hs) * csize        # Q scratch
                + 4 * D * D * csize + 4 * D * 4)           # weights + biases
    try:
        vmem_cap = int(pltpu.get_tpu_info().vmem_capacity_bytes)
    except Exception:
        vmem_cap = 64 * 1024 * 1024
    vmem_limit = int(min(max(2 * est_vmem, 32 * 1024 * 1024),
                         vmem_cap - 2 * 1024 * 1024))

    cost = pl.CostEstimate(
        flops=int(2 * B * s_pad * D * 3 * D                 # Q/K/V projections
                  + 4 * B * heads * s_pad * s_pad * hs      # QK^T and PV
                  + 2 * B * s_pad * D * D),                  # output projection
        transcendentals=int(B * heads * s_pad * s_pad),
        bytes_accessed=int(x_in.size * csize + 4 * D * D * csize
                           + B * s_pad * D * jnp.dtype(out_dtype).itemsize),
    )

    out = pl.pallas_call(
        kernel,
        out_shape=jax.ShapeDtypeStruct((B, s_pad, D), out_dtype),
        grid_spec=grid_spec,
        compiler_params=pltpu.CompilerParams(
            # qi must stay the inner sequential axis: later query tiles reuse
            # the K|V cache written at qi == 0.
            dimension_semantics=("parallel", "arbitrary"),
            vmem_limit_bytes=vmem_limit),
        cost_estimate=cost,
    )(x_in, wq, bq, wkv, bkv, wo, bo)

    return out[:, :S, :] if s_pad != S else out


def reference_mha(x, params, heads):
    """Plain-JAX reference mirroring the PyTorch module exactly."""
    B, S, D = x.shape
    hs = D // heads

    def lin(t, w, b):
        return t @ w + b[0]

    q = lin(x, params["wq"], params["bq"])
    k = lin(x, params["wk"], params["bk"])
    v = lin(x, params["wv"], params["bv"])

    def split(t):
        return t.reshape(B, S, heads, hs).transpose(0, 2, 1, 3)   # (B, H, S, hs)

    Q, K, V = split(q), split(k), split(v)
    scores = jnp.einsum("bhqd,bhkd->bhqk", Q, K) / jnp.sqrt(jnp.float32(hs))
    attn = jax.nn.softmax(scores, axis=-1)
    out = jnp.einsum("bhqk,bhkd->bhqd", attn, V)
    out = out.transpose(0, 2, 1, 3).reshape(B, S, D)
    return lin(out, params["wo"], params["bo"])


def init_params(key, dmodel):
    """Deterministic parameter init (synthetic; PyTorch-Linear-shaped)."""
    keys = jax.random.split(key, 8)
    bound = 1.0 / jnp.sqrt(jnp.float32(dmodel))

    def w(k):
        return jax.random.uniform(k, (dmodel, dmodel), jnp.float32, -bound, bound)

    def b(k):
        return jax.random.uniform(k, (1, dmodel), jnp.float32, -bound, bound)

    return {
        "wq": w(keys[0]), "bq": b(keys[1]),
        "wk": w(keys[2]), "bk": b(keys[3]),
        "wv": w(keys[4]), "bv": b(keys[5]),
        "wo": w(keys[6]), "bo": b(keys[7]),
    }


if __name__ == "__main__":
    batch, seq, dmodel, heads = 2, 8, 32, 4

    key = jax.random.PRNGKey(0)
    kx, kp = jax.random.split(key)
    x = jax.random.normal(kx, (batch, seq, dmodel), jnp.float32)
    params = init_params(kp, dmodel)

    # f32 path: preserves the PyTorch module's numerics.
    out = jax.block_until_ready(multi_head_attention(x, params, heads))
    ref = reference_mha(x, params, heads)
    assert out.shape == (batch, seq, dmodel)
    assert jnp.allclose(out, ref, atol=1e-3, rtol=1e-3), "f32 mismatch vs reference"

    # Ragged sequence length -> exercises the padding + key-masking path.
    x_r = jax.random.normal(kx, (batch, 12, dmodel), jnp.float32)
    out_r = jax.block_until_ready(multi_head_attention(x_r, params, heads))
    ref_r = reference_mha(x_r, params, heads)
    assert out_r.shape == (batch, 12, dmodel)
    assert jnp.allclose(out_r, ref_r, atol=1e-3, rtol=1e-3), "padded mismatch vs reference"

    # bf16 MXU-operand path (f32 accumulation): the v6e/v7x perf configuration.
    out_bf = jax.block_until_ready(
        multi_head_attention(x, params, heads, compute_dtype=jnp.bfloat16))
    assert jnp.allclose(out_bf, ref, atol=1e-1, rtol=1e-1), "bf16 mismatch vs reference"

    print("KERNEL_OK")
</pallas_src>

<mosaic_0001>
module attributes {stable_mosaic.version = 11 : i64} {
  func.func @mha_kernel(%arg0: i32, %arg1: i32, %arg2: memref<1x8x32xf32, #tpu.memory_space<vmem>>, %arg3: memref<32x32xf32, #tpu.memory_space<vmem>>, %arg4: memref<1x32xf32, #tpu.memory_space<vmem>>, %arg5: memref<32x64xf32, #tpu.memory_space<vmem>>, %arg6: memref<1x64xf32, #tpu.memory_space<vmem>>, %arg7: memref<4x8x32xf32, #tpu.memory_space<vmem>>, %arg8: memref<1x32xf32, #tpu.memory_space<vmem>>, %arg9: memref<1x8x32xf32, #tpu.memory_space<vmem>>, %arg10: memref<8x8x8xf32, #tpu.memory_space<vmem>>, %arg11: memref<4x8x8xf32, #tpu.memory_space<vmem>>) attributes {dimension_semantics = [#tpu.dimension_semantics<parallel>, #tpu.dimension_semantics<arbitrary>], iteration_bounds = array<i64: 2, 1>, scalar_prefetch = 0 : i64, scratch_operands = 2 : i64, tpu.core_type = #tpu.core_type<tc>, window_params = [{transform_indices = @transform_0, window_bounds = array<i64: 1, 8, 32>}, {pipeline_mode = #tpu.pipeline_mode<synchronous>, transform_indices = @transform_1, window_bounds = array<i64: 32, 32>}, {pipeline_mode = #tpu.pipeline_mode<synchronous>, transform_indices = @transform_2, window_bounds = array<i64: 1, 32>}, {pipeline_mode = #tpu.pipeline_mode<synchronous>, transform_indices = @transform_3, window_bounds = array<i64: 32, 64>}, {pipeline_mode = #tpu.pipeline_mode<synchronous>, transform_indices = @transform_4, window_bounds = array<i64: 1, 64>}, {pipeline_mode = #tpu.pipeline_mode<synchronous>, transform_indices = @transform_5, window_bounds = array<i64: 4, 8, 32>}, {pipeline_mode = #tpu.pipeline_mode<synchronous>, transform_indices = @transform_6, window_bounds = array<i64: 1, 32>}, {transform_indices = @transform_7, window_bounds = array<i64: 1, 8, 32>}]} {
    %c0_i32 = arith.constant 0 : i32
    %0 = arith.cmpi eq, %arg1, %c0_i32 : i32
    %1 = arith.extui %0 : i1 to i32
    %c0_i32_0 = arith.constant 0 : i32
    %2 = arith.cmpi ne, %1, %c0_i32_0 : i32
    scf.if %2 {
      %c0_49 = arith.constant 0 : index
      %c0_50 = arith.constant 0 : index
      %c0_51 = arith.constant 0 : index
      %78 = vector.load %arg2[%c0_49, %c0_50, %c0_51] : memref<1x8x32xf32, #tpu.memory_space<vmem>>, vector<1x8x32xf32>
      %79 = vector.shape_cast %78 : vector<1x8x32xf32> to vector<8x32xf32>
      %c0_52 = arith.constant 0 : index
      %c0_53 = arith.constant 0 : index
      %80 = vector.load %arg5[%c0_52, %c0_53] : memref<32x64xf32, #tpu.memory_space<vmem>>, vector<32x64xf32>
      %cst_54 = arith.constant dense<0.000000e+00> : vector<8x64xf32>
      %81 = tpu.matmul %79, %80, %cst_54 {dimension_numbers = #tpu.dot_dimension_numbers<[1], [0], [0], [1], [0, 0, 1, 1], [], []>} : vector<8x32xf32>, vector<32x64xf32>, vector<8x64xf32> -> vector<8x64xf32>
      %c0_55 = arith.constant 0 : index
      %c0_56 = arith.constant 0 : index
      %82 = vector.load %arg6[%c0_55, %c0_56] : memref<1x64xf32, #tpu.memory_space<vmem>>, vector<1x64xf32>
      %83 = vector.shape_cast %82 : vector<1x64xf32> to vector<64xf32>
      %84 = vector.shape_cast %83 : vector<64xf32> to vector<1x64xf32>
      %85 = vector.broadcast %84 : vector<1x64xf32> to vector<8x64xf32>
      %86 = arith.addf %81, %85 : vector<8x64xf32>
      %87 = vector.extract_strided_slice %86 {offsets = [0, 0], sizes = [8, 8], strides = [1, 1]} : vector<8x64xf32> to vector<8x8xf32>
      %c0_57 = arith.constant 0 : index
      %c0_58 = arith.constant 0 : index
      %c0_59 = arith.constant 0 : index
      %88 = vector.load %arg10[%c0_57, %c0_58, %c0_59] : memref<8x8x8xf32, #tpu.memory_space<vmem>>, vector<1x8x8xf32>
      %89 = vector.shape_cast %88 : vector<1x8x8xf32> to vector<8x8xf32>
      %90 = vector.shape_cast %87 : vector<8x8xf32> to vector<1x8x8xf32>
      tpu.vector_store %arg10[%c0_57, %c0_58, %c0_59], %90 {strides = array<i32>} : memref<8x8x8xf32, #tpu.memory_space<vmem>>, vector<1x8x8xf32>,
      %91 = vector.extract_strided_slice %86 {offsets = [0, 8], sizes = [8, 8], strides = [1, 1]} : vector<8x64xf32> to vector<8x8xf32>
      %c1_60 = arith.constant 1 : index
      %c0_61 = arith.constant 0 : index
      %c0_62 = arith.constant 0 : index
      %92 = vector.load %arg10[%c1_60, %c0_61, %c0_62] : memref<8x8x8xf32, #tpu.memory_space<vmem>>, vector<1x8x8xf32>
      %93 = vector.shape_cast %92 : vector<1x8x8xf32> to vector<8x8xf32>
      %94 = vector.shape_cast %91 : vector<8x8xf32> to vector<1x8x8xf32>
      tpu.vector_store %arg10[%c1_60, %c0_61, %c0_62], %94 {strides = array<i32>} : memref<8x8x8xf32, #tpu.memory_space<vmem>>, vector<1x8x8xf32>,
      %95 = vector.extract_strided_slice %86 {offsets = [0, 16], sizes = [8, 8], strides = [1, 1]} : vector<8x64xf32> to vector<8x8xf32>
      %c2_63 = arith.constant 2 : index
      %c0_64 = arith.constant 0 : index
      %c0_65 = arith.constant 0 : index
      %96 = vector.load %arg10[%c2_63, %c0_64, %c0_65] : memref<8x8x8xf32, #tpu.memory_space<vmem>>, vector<1x8x8xf32>
      %97 = vector.shape_cast %96 : vector<1x8x8xf32> to vector<8x8xf32>
      %98 = vector.shape_cast %95 : vector<8x8xf32> to vector<1x8x8xf32>
      tpu.vector_store %arg10[%c2_63, %c0_64, %c0_65], %98 {strides = array<i32>} : memref<8x8x8xf32, #tpu.memory_space<vmem>>, vector<1x8x8xf32>,
      %99 = vector.extract_strided_slice %86 {offsets = [0, 24], sizes = [8, 8], strides = [1, 1]} : vector<8x64xf32> to vector<8x8xf32>
      %c3_66 = arith.constant 3 : index
      %c0_67 = arith.constant 0 : index
      %c0_68 = arith.constant 0 : index
      %100 = vector.load %arg10[%c3_66, %c0_67, %c0_68] : memref<8x8x8xf32, #tpu.memory_space<vmem>>, vector<1x8x8xf32>
      %101 = vector.shape_cast %100 : vector<1x8x8xf32> to vector<8x8xf32>
      %102 = vector.shape_cast %99 : vector<8x8xf32> to vector<1x8x8xf32>
      tpu.vector_store %arg10[%c3_66, %c0_67, %c0_68], %102 {strides = array<i32>} : memref<8x8x8xf32, #tpu.memory_space<vmem>>, vector<1x8x8xf32>,
      %103 = vector.extract_strided_slice %86 {offsets = [0, 32], sizes = [8, 8], strides = [1, 1]} : vector<8x64xf32> to vector<8x8xf32>
      %c4_69 = arith.constant 4 : index
      %c0_70 = arith.constant 0 : index
      %c0_71 = arith.constant 0 : index
      %104 = vector.load %arg10[%c4_69, %c0_70, %c0_71] : memref<8x8x8xf32, #tpu.memory_space<vmem>>, vector<1x8x8xf32>
      %105 = vector.shape_cast %104 : vector<1x8x8xf32> to vector<8x8xf32>
      %106 = vector.shape_cast %103 : vector<8x8xf32> to vector<1x8x8xf32>
      tpu.vector_store %arg10[%c4_69, %c0_70, %c0_71], %106 {strides = array<i32>} : memref<8x8x8xf32, #tpu.memory_space<vmem>>, vector<1x8x8xf32>,
      %107 = vector.extract_strided_slice %86 {offsets = [0, 40], sizes = [8, 8], strides = [1, 1]} : vector<8x64xf32> to vector<8x8xf32>
      %c5 = arith.constant 5 : index
      %c0_72 = arith.constant 0 : index
      %c0_73 = arith.constant 0 : index
      %108 = vector.load %arg10[%c5, %c0_72, %c0_73] : memref<8x8x8xf32, #tpu.memory_space<vmem>>, vector<1x8x8xf32>
      %109 = vector.shape_cast %108 : vector<1x8x8xf32> to vector<8x8xf32>
      %110 = vector.shape_cast %107 : vector<8x8xf32> to vector<1x8x8xf32>
      tpu.vector_store %arg10[%c5, %c0_72, %c0_73], %110 {strides = array<i32>} : memref<8x8x8xf32, #tpu.memory_space<vmem>>, vector<1x8x8xf32>,
      %111 = vector.extract_strided_slice %86 {offsets = [0, 48], sizes = [8, 8], strides = [1, 1]} : vector<8x64xf32> to vector<8x8xf32>
      %c6 = arith.constant 6 : index
      %c0_74 = arith.constant 0 : index
      %c0_75 = arith.constant 0 : index
      %112 = vector.load %arg10[%c6, %c0_74, %c0_75] : memref<8x8x8xf32, #tpu.memory_space<vmem>>, vector<1x8x8xf32>
      %113 = vector.shape_cast %112 : vector<1x8x8xf32> to vector<8x8xf32>
      %114 = vector.shape_cast %111 : vector<8x8xf32> to vector<1x8x8xf32>
      tpu.vector_store %arg10[%c6, %c0_74, %c0_75], %114 {strides = array<i32>} : memref<8x8x8xf32, #tpu.memory_space<vmem>>, vector<1x8x8xf32>,
      %115 = vector.extract_strided_slice %86 {offsets = [0, 56], sizes = [8, 8], strides = [1, 1]} : vector<8x64xf32> to vector<8x8xf32>
      %c7 = arith.constant 7 : index
      %c0_76 = arith.constant 0 : index
      %c0_77 = arith.constant 0 : index
      %116 = vector.load %arg10[%c7, %c0_76, %c0_77] : memref<8x8x8xf32, #tpu.memory_space<vmem>>, vector<1x8x8xf32>
      %117 = vector.shape_cast %116 : vector<1x8x8xf32> to vector<8x8xf32>
      %118 = vector.shape_cast %115 : vector<8x8xf32> to vector<1x8x8xf32>
      tpu.vector_store %arg10[%c7, %c0_76, %c0_77], %118 {strides = array<i32>} : memref<8x8x8xf32, #tpu.memory_space<vmem>>, vector<1x8x8xf32>,
    } else {
    }
    %c8_i32 = arith.constant 8 : i32
    %3 = arith.muli %arg1, %c8_i32 : i32
    %4 = tpu.assume_multiple %3, 8 : i32
    %c0 = arith.constant 0 : index
    %5 = arith.index_cast %4 : i32 to index
    %c0_1 = arith.constant 0 : index
    %6 = vector.load %arg2[%c0, %5, %c0_1] : memref<1x8x32xf32, #tpu.memory_space<vmem>>, vector<1x8x32xf32>
    %7 = vector.shape_cast %6 : vector<1x8x32xf32> to vector<8x32xf32>
    %c0_2 = arith.constant 0 : index
    %c0_3 = arith.constant 0 : index
    %8 = vector.load %arg3[%c0_2, %c0_3] : memref<32x32xf32, #tpu.memory_space<vmem>>, vector<32x32xf32>
    %cst = arith.constant dense<0.000000e+00> : vector<8x32xf32>
    %9 = tpu.matmul %7, %8, %cst {dimension_numbers = #tpu.dot_dimension_numbers<[1], [0], [0], [1], [0, 0, 1, 1], [], []>} : vector<8x32xf32>, vector<32x32xf32>, vector<8x32xf32> -> vector<8x32xf32>
    %c0_4 = arith.constant 0 : index
    %c0_5 = arith.constant 0 : index
    %10 = vector.load %arg4[%c0_4, %c0_5] : memref<1x32xf32, #tpu.memory_space<vmem>>, vector<1x32xf32>
    %11 = vector.shape_cast %10 : vector<1x32xf32> to vector<32xf32>
    %12 = vector.shape_cast %11 : vector<32xf32> to vector<1x32xf32>
    %13 = vector.broadcast %12 : vector<1x32xf32> to vector<8x32xf32>
    %14 = arith.addf %9, %13 : vector<8x32xf32>
    %15 = vector.extract_strided_slice %14 {offsets = [0, 0], sizes = [8, 8], strides = [1, 1]} : vector<8x32xf32> to vector<8x8xf32>
    %c0_6 = arith.constant 0 : index
    %c0_7 = arith.constant 0 : index
    %c0_8 = arith.constant 0 : index
    %16 = vector.load %arg11[%c0_6, %c0_7, %c0_8] : memref<4x8x8xf32, #tpu.memory_space<vmem>>, vector<1x8x8xf32>
    %17 = vector.shape_cast %16 : vector<1x8x8xf32> to vector<8x8xf32>
    %18 = vector.shape_cast %15 : vector<8x8xf32> to vector<1x8x8xf32>
    tpu.vector_store %arg11[%c0_6, %c0_7, %c0_8], %18 {strides = array<i32>} : memref<4x8x8xf32, #tpu.memory_space<vmem>>, vector<1x8x8xf32>,
    %19 = vector.extract_strided_slice %14 {offsets = [0, 8], sizes = [8, 8], strides = [1, 1]} : vector<8x32xf32> to vector<8x8xf32>
    %c1 = arith.constant 1 : index
    %c0_9 = arith.constant 0 : index
    %c0_10 = arith.constant 0 : index
    %20 = vector.load %arg11[%c1, %c0_9, %c0_10] : memref<4x8x8xf32, #tpu.memory_space<vmem>>, vector<1x8x8xf32>
    %21 = vector.shape_cast %20 : vector<1x8x8xf32> to vector<8x8xf32>
    %22 = vector.shape_cast %19 : vector<8x8xf32> to vector<1x8x8xf32>
    tpu.vector_store %arg11[%c1, %c0_9, %c0_10], %22 {strides = array<i32>} : memref<4x8x8xf32, #tpu.memory_space<vmem>>, vector<1x8x8xf32>,
    %23 = vector.extract_strided_slice %14 {offsets = [0, 16], sizes = [8, 8], strides = [1, 1]} : vector<8x32xf32> to vector<8x8xf32>
    %c2 = arith.constant 2 : index
    %c0_11 = arith.constant 0 : index
    %c0_12 = arith.constant 0 : index
    %24 = vector.load %arg11[%c2, %c0_11, %c0_12] : memref<4x8x8xf32, #tpu.memory_space<vmem>>, vector<1x8x8xf32>
    %25 = vector.shape_cast %24 : vector<1x8x8xf32> to vector<8x8xf32>
    %26 = vector.shape_cast %23 : vector<8x8xf32> to vector<1x8x8xf32>
    tpu.vector_store %arg11[%c2, %c0_11, %c0_12], %26 {strides = array<i32>} : memref<4x8x8xf32, #tpu.memory_space<vmem>>, vector<1x8x8xf32>,
    %27 = vector.extract_strided_slice %14 {offsets = [0, 24], sizes = [8, 8], strides = [1, 1]} : vector<8x32xf32> to vector<8x8xf32>
    %c3 = arith.constant 3 : index
    %c0_13 = arith.constant 0 : index
    %c0_14 = arith.constant 0 : index
    %28 = vector.load %arg11[%c3, %c0_13, %c0_14] : memref<4x8x8xf32, #tpu.memory_space<vmem>>, vector<1x8x8xf32>
    %29 = vector.shape_cast %28 : vector<1x8x8xf32> to vector<8x8xf32>
    %30 = vector.shape_cast %27 : vector<8x8xf32> to vector<1x8x8xf32>
    tpu.vector_store %arg11[%c3, %c0_13, %c0_14], %30 {strides = array<i32>} : memref<4x8x8xf32, #tpu.memory_space<vmem>>, vector<1x8x8xf32>,
    %c0_15 = arith.constant 0 : index
    %c0_16 = arith.constant 0 : index
    %c0_17 = arith.constant 0 : index
    %31 = vector.load %arg11[%c0_15, %c0_16, %c0_17] : memref<4x8x8xf32, #tpu.memory_space<vmem>>, vector<4x8x8xf32>
    %c0_18 = arith.constant 0 : index
    %c0_19 = arith.constant 0 : index
    %c0_20 = arith.constant 0 : index
    %32 = vector.load %arg10[%c0_18, %c0_19, %c0_20] : memref<8x8x8xf32, #tpu.memory_space<vmem>>, vector<4x8x8xf32>
    %c4 = arith.constant 4 : index
    %c0_21 = arith.constant 0 : index
    %c0_22 = arith.constant 0 : index
    %33 = vector.load %arg10[%c4, %c0_21, %c0_22] : memref<8x8x8xf32, #tpu.memory_space<vmem>>, vector<4x8x8xf32>
    "tpu.trace_start"() <{level = 10 : i32, message = "hqd,hkd->hqk"}> : () -> ()
    %cst_23 = arith.constant dense<0.000000e+00> : vector<4x8x8xf32>
    %34 = tpu.matmul %31, %32, %cst_23 {dimension_numbers = #tpu.dot_dimension_numbers<[2], [2], [1], [1], [0, 0, 0, 1, 1, 1], [0], [0]>} : vector<4x8x8xf32>, vector<4x8x8xf32>, vector<4x8x8xf32> -> vector<4x8x8xf32>
    "tpu.trace_stop"() : () -> ()
    %cst_24 = arith.constant dense<0xFF800000> : vector<4x8xf32>
    %35 = vector.multi_reduction <maximumf>, %34, %cst_24 [2] : vector<4x8x8xf32> to vector<4x8xf32>
    %36 = vector.shape_cast %35 : vector<4x8xf32> to vector<4x8x1xf32>
    %37 = vector.broadcast %36 : vector<4x8x1xf32> to vector<4x8x8xf32>
    %38 = arith.subf %34, %37 : vector<4x8x8xf32>
    %39 = math.exp %38 : vector<4x8x8xf32>
    %cst_25 = arith.constant dense<0.000000e+00> : vector<4x8xf32>
    %40 = vector.multi_reduction <add>, %39, %cst_25 [2] : vector<4x8x8xf32> to vector<4x8xf32>
    %41 = vector.shape_cast %40 : vector<4x8xf32> to vector<4x8x1xf32>
    "tpu.trace_start"() <{level = 10 : i32, message = "hqk,hkd->hqd"}> : () -> ()
    %cst_26 = arith.constant dense<0.000000e+00> : vector<4x8x8xf32>
    %42 = tpu.matmul %39, %33, %cst_26 {dimension_numbers = #tpu.dot_dimension_numbers<[2], [1], [1], [2], [0, 0, 0, 1, 1, 2], [0], [0]>} : vector<4x8x8xf32>, vector<4x8x8xf32>, vector<4x8x8xf32> -> vector<4x8x8xf32>
    "tpu.trace_stop"() : () -> ()
    %43 = vector.broadcast %41 : vector<4x8x1xf32> to vector<4x8x8xf32>
    %44 = arith.divf %42, %43 : vector<4x8x8xf32>
    %cst_27 = arith.constant 0.000000e+00 : f32
    %45 = vector.broadcast %cst_27 : f32 to vector<8x32xf32>
    %46 = vector.extract_strided_slice %44 {offsets = [0, 0, 0], sizes = [1, 8, 8], strides = [1, 1, 1]} : vector<4x8x8xf32> to vector<1x8x8xf32>
    %47 = vector.shape_cast %46 : vector<1x8x8xf32> to vector<8x8xf32>
    %c0_28 = arith.constant 0 : index
    %c0_29 = arith.constant 0 : index
    %c0_30 = arith.constant 0 : index
    %48 = vector.load %arg7[%c0_28, %c0_29, %c0_30] : memref<4x8x32xf32, #tpu.memory_space<vmem>>, vector<1x8x32xf32>
    %49 = vector.shape_cast %48 : vector<1x8x32xf32> to vector<8x32xf32>
    %cst_31 = arith.constant dense<0.000000e+00> : vector<8x32xf32>
    %50 = tpu.matmul %47, %49, %cst_31 {dimension_numbers = #tpu.dot_dimension_numbers<[1], [0], [0], [1], [0, 0, 1, 1], [], []>} : vector<8x8xf32>, vector<8x32xf32>, vector<8x32xf32> -> vector<8x32xf32>
    %51 = arith.addf %45, %50 : vector<8x32xf32>
    %52 = vector.extract_strided_slice %44 {offsets = [1, 0, 0], sizes = [1, 8, 8], strides = [1, 1, 1]} : vector<4x8x8xf32> to vector<1x8x8xf32>
    %53 = vector.shape_cast %52 : vector<1x8x8xf32> to vector<8x8xf32>
    %c1_32 = arith.constant 1 : index
    %c0_33 = arith.constant 0 : index
    %c0_34 = arith.constant 0 : index
    %54 = vector.load %arg7[%c1_32, %c0_33, %c0_34] : memref<4x8x32xf32, #tpu.memory_space<vmem>>, vector<1x8x32xf32>
    %55 = vector.shape_cast %54 : vector<1x8x32xf32> to vector<8x32xf32>
    %cst_35 = arith.constant dense<0.000000e+00> : vector<8x32xf32>
    %56 = tpu.matmul %53, %55, %cst_35 {dimension_numbers = #tpu.dot_dimension_numbers<[1], [0], [0], [1], [0, 0, 1, 1], [], []>} : vector<8x8xf32>, vector<8x32xf32>, vector<8x32xf32> -> vector<8x32xf32>
    %57 = arith.addf %51, %56 : vector<8x32xf32>
    %58 = vector.extract_strided_slice %44 {offsets = [2, 0, 0], sizes = [1, 8, 8], strides = [1, 1, 1]} : vector<4x8x8xf32> to vector<1x8x8xf32>
    %59 = vector.shape_cast %58 : vector<1x8x8xf32> to vector<8x8xf32>
    %c2_36 = arith.constant 2 : index
    %c0_37 = arith.constant 0 : index
    %c0_38 = arith.constant 0 : index
    %60 = vector.load %arg7[%c2_36, %c0_37, %c0_38] : memref<4x8x32xf32, #tpu.memory_space<vmem>>, vector<1x8x32xf32>
    %61 = vector.shape_cast %60 : vector<1x8x32xf32> to vector<8x32xf32>
    %cst_39 = arith.constant dense<0.000000e+00> : vector<8x32xf32>
    %62 = tpu.matmul %59, %61, %cst_39 {dimension_numbers = #tpu.dot_dimension_numbers<[1], [0], [0], [1], [0, 0, 1, 1], [], []>} : vector<8x8xf32>, vector<8x32xf32>, vector<8x32xf32> -> vector<8x32xf32>
    %63 = arith.addf %57, %62 : vector<8x32xf32>
    %64 = vector.extract_strided_slice %44 {offsets = [3, 0, 0], sizes = [1, 8, 8], strides = [1, 1, 1]} : vector<4x8x8xf32> to vector<1x8x8xf32>
    %65 = vector.shape_cast %64 : vector<1x8x8xf32> to vector<8x8xf32>
    %c3_40 = arith.constant 3 : index
    %c0_41 = arith.constant 0 : index
    %c0_42 = arith.constant 0 : index
    %66 = vector.load %arg7[%c3_40, %c0_41, %c0_42] : memref<4x8x32xf32, #tpu.memory_space<vmem>>, vector<1x8x32xf32>
    %67 = vector.shape_cast %66 : vector<1x8x32xf32> to vector<8x32xf32>
    %cst_43 = arith.constant dense<0.000000e+00> : vector<8x32xf32>
    %68 = tpu.matmul %65, %67, %cst_43 {dimension_numbers = #tpu.dot_dimension_numbers<[1], [0], [0], [1], [0, 0, 1, 1], [], []>} : vector<8x8xf32>, vector<8x32xf32>, vector<8x32xf32> -> vector<8x32xf32>
    %69 = arith.addf %63, %68 : vector<8x32xf32>
    %c0_44 = arith.constant 0 : index
    %c0_45 = arith.constant 0 : index
    %70 = vector.load %arg8[%c0_44, %c0_45] : memref<1x32xf32, #tpu.memory_space<vmem>>, vector<1x32xf32>
    %71 = vector.shape_cast %70 : vector<1x32xf32> to vector<32xf32>
    %72 = vector.shape_cast %71 : vector<32xf32> to vector<1x32xf32>
    %73 = vector.broadcast %72 : vector<1x32xf32> to vector<8x32xf32>
    %74 = arith.addf %69, %73 : vector<8x32xf32>
    %c0_46 = arith.constant 0 : index
    %c0_47 = arith.constant 0 : index
    %c0_48 = arith.constant 0 : index
    %75 = vector.load %arg9[%c0_46, %c0_47, %c0_48] : memref<1x8x32xf32, #tpu.memory_space<vmem>>, vector<1x8x32xf32>
    %76 = vector.shape_cast %75 : vector<1x8x32xf32> to vector<8x32xf32>
    %77 = vector.shape_cast %74 : vector<8x32xf32> to vector<1x8x32xf32>
    tpu.vector_store %arg9[%c0_46, %c0_47, %c0_48], %77 {strides = array<i32>} : memref<1x8x32xf32, #tpu.memory_space<vmem>>, vector<1x8x32xf32>,
    return
  }
  func.func @transform_0(%arg0: i32, %arg1: i32) -> (i32, i32, i32) {
    %c0_i32 = arith.constant 0 : i32
    %c0_i32_0 = arith.constant 0 : i32
    %c0_i32_1 = arith.constant 0 : i32
    return %arg0, %c0_i32, %c0_i32_0 : i32, i32, i32
  }
  func.func @transform_1(%arg0: i32, %arg1: i32) -> (i32, i32) {
    %c0_i32 = arith.constant 0 : i32
    %c0_i32_0 = arith.constant 0 : i32
    %c0_i32_1 = arith.constant 0 : i32
    return %c0_i32, %c0_i32_0 : i32, i32
  }
  func.func @transform_2(%arg0: i32, %arg1: i32) -> (i32, i32) {
    %c0_i32 = arith.constant 0 : i32
    %c0_i32_0 = arith.constant 0 : i32
    %c0_i32_1 = arith.constant 0 : i32
    return %c0_i32, %c0_i32_0 : i32, i32
  }
  func.func @transform_3(%arg0: i32, %arg1: i32) -> (i32, i32) {
    %c0_i32 = arith.constant 0 : i32
    %c0_i32_0 = arith.constant 0 : i32
    %c0_i32_1 = arith.constant 0 : i32
    return %c0_i32, %c0_i32_0 : i32, i32
  }
  func.func @transform_4(%arg0: i32, %arg1: i32) -> (i32, i32) {
    %c0_i32 = arith.constant 0 : i32
    %c0_i32_0 = arith.constant 0 : i32
    %c0_i32_1 = arith.constant 0 : i32
    return %c0_i32, %c0_i32_0 : i32, i32
  }
  func.func @transform_5(%arg0: i32, %arg1: i32) -> (i32, i32, i32) {
    %c0_i32 = arith.constant 0 : i32
    %c0_i32_0 = arith.constant 0 : i32
    %c0_i32_1 = arith.constant 0 : i32
    %c0_i32_2 = arith.constant 0 : i32
    return %c0_i32, %c0_i32_0, %c0_i32_1 : i32, i32, i32
  }
  func.func @transform_6(%arg0: i32, %arg1: i32) -> (i32, i32) {
    %c0_i32 = arith.constant 0 : i32
    %c0_i32_0 = arith.constant 0 : i32
    %c0_i32_1 = arith.constant 0 : i32
    return %c0_i32, %c0_i32_0 : i32, i32
  }
  func.func @transform_7(%arg0: i32, %arg1: i32) -> (i32, i32, i32) {
    %c0_i32 = arith.constant 0 : i32
    %c0_i32_0 = arith.constant 0 : i32
    return %arg0, %arg1, %c0_i32 : i32, i32, i32
  }
}

</mosaic_0001>

<llo_original>
// kernel: tpu_custom_call.1
$region0: #{tpu_custom_call.1}
  #allocation0 [shape = 'u32[]', space=smem, size = 0x4, offset = 0x4, fixed_abs, tag = 'smem constant byte address 0x4 - core index']
  #allocation1 [shape = 'u32[72,128]{1,0:T(1,128)}', space=vmem, size = 0x9000, scoped, tag = 'internal scratch']
  #allocation2 [shape = 'f32[8,8,8]{2,1,0:T(8,128)}', space=vmem, size = 0x8000, scoped, tag = 'scratch operand']
  #allocation3 [shape = 'f32[4,8,8]{2,1,0:T(8,128)}', space=vmem, size = 0x4000, scoped, tag = 'scratch operand']
  %s0 = inlined_call_operand.hbm [shape: f32[2,8,32], index: 0, kind: input, shape index: {}]
  %s1 = inlined_call_operand.hbm [shape: f32[32,32], index: 1, kind: input, shape index: {}]
  %s2 = inlined_call_operand.vmem [shape: f32[1,32], index: 2, kind: input, shape index: {}]
  %s3 = inlined_call_operand.hbm [shape: f32[32,64], index: 3, kind: input, shape index: {}]
  %s4 = inlined_call_operand.vmem [shape: f32[1,64], index: 4, kind: input, shape index: {}]
  %s5 = inlined_call_operand.hbm [shape: f32[4,8,32], index: 5, kind: input, shape index: {}]
  %s6 = inlined_call_operand.vmem [shape: f32[1,32], index: 6, kind: input, shape index: {}]
  %s7 = inlined_call_operand.hbm [shape: f32[2,8,32], index: 7, kind: output, shape index: {}]
  %s8 = sld [smem:[#allocation0]]
  $region81: #{tpu_custom_call.1} parent=0
    _
  %s10 = ssub.s32 1, %s8
  %s11 = scalar_select 0, %s10, %s8
  $region1: #{tpu_custom_call.1} parent=0
    #allocation4 [shape = 'u8[8192]{0}', space=vmem, size = 0x2000, scoped, tag = 'input window, operand 0']
    #allocation5 [shape = 's32[2]{0}', space=sflag, size = 0x8, scoped, tag = 'scoped memory for tpu_custom_call.1']
    #allocation6 [shape = 's32[2]{0}', space=sflag, size = 0x8, scoped, tag = 'scoped memory for tpu_custom_call.1']
    #allocation7 [shape = 'u8[16384]{0}', space=vmem, size = 0x4000, scoped, tag = 'input window, operand 1, single buffered']
    #allocation8 [shape = 's32[1]{0}', space=sflag, size = 0x4, scoped, tag = 'scoped memory for tpu_custom_call.1']
    #allocation9 [shape = 'u8[16384]{0}', space=vmem, size = 0x4000, scoped, tag = 'input window, operand 3, single buffered']
    #allocation10 [shape = 'u8[16384]{0}', space=vmem, size = 0x4000, scoped, tag = 'input window, operand 5, single buffered']
    #allocation11 [shape = 's32[1]{0}', space=sflag, size = 0x4, scoped, tag = 'scoped memory for tpu_custom_call.1']
    #allocation12 [shape = 'u8[8192]{0}', space=vmem, size = 0x2000, scoped, tag = 'output window, operand 0']
    %12 = vsyncpa [#allocation5], 0
    %s13 = scalar_lea.sflag [#allocation5], 1
    %14 = vsyncpa %s13, 0
    %15 = vsyncpa [#allocation8], 0
    %16 = vsyncpa [#allocation11], 0
    %17 = vsyncpa [#allocation6], 0
    %s18 = scalar_lea.sflag [#allocation6], 1
    %19 = vsyncpa %s18, 0
    loop: start=0, step=1, limit=4
    $region2: #{tpu_custom_call.1} parent=1 // loop_pre_header
      _
    $region3: #{tpu_custom_call.1} parent=1 // loop_header
      %s21 = sphi 0, %s25
      %p22 = scmp.ge.s32.totalorder %s21, 4
      %s28 = sphi 0, %s40
      %s29 = sphi 0, %s36
      %s30 = sphi 0, %s28
      %s31 = sphi 0, %s29
      %s32 = sphi 0, %s30
      %s33 = sphi 0, %s31
      %s43 = sphi 0, %s45
      %s46 = sphi 0, %s43
      %s47 = sphi 0, %s46
      %s63 = sphi 0, %s47
      %s67 = sphi 0, %s67
      %s69 = sphi 0, %s67
      %s70 = sphi 0, %s69
      %s84 = sphi 0, %s70
      %s88 = sphi 0, %s88
      %s90 = sphi 0, %s88
      %s91 = sphi 0, %s90
      %s105 = sphi 0, %s91
      %s109 = sphi 0, %s109
      %s111 = sphi 0, %s109
      %s112 = sphi 0, %s111
      %s126 = sphi 0, %s112
      %s130 = sphi 0, %s130
      %s132 = sphi 0, %s130
      %s133 = sphi 0, %s132
      %s147 = sphi 0, %s133
      %s151 = sphi 0, %s151
      %s153 = sphi 0, %s151
      %s154 = sphi 0, %s153
      %s168 = sphi 0, %s154
      %s172 = sphi 0, %s172
      %s174 = sphi 0, %s172
      %s175 = sphi 0, %s174
      %s189 = sphi 0, %s175
      %s197 = sphi 0, %s199
      %s200 = sphi 0, %s197
      %s201 = sphi 0, %s200
      %s217 = sphi 0, %s201
    $region4: #{tpu_custom_call.1} parent=1 // loop_header_branch
      %24 = sbr.rel (%p22) target = $region8
    $region5: #{tpu_custom_call.1} parent=1 // loop_body
      %s26 = ssub.s32 %s21, 1
      %s27 = ssub.s32 %s21, 2
      %s34 = sadd.s32 1, %s29
      %p35 = scmp.ge.s32.totalorder %s34, 1
      %s36 = scalar_select %p35, 0, %s34
      %s37 = sadd.s32 1, %s28
      %s38 = scalar_select %p35, %s37, %s28
      %p39 = scmp.ge.s32.totalorder %s38, 2
      %s40 = scalar_select %p39, 0, %s38
      %s41 = ssub.s32 %s28, %s40
      %p42 = scmp.eq.s32.totalorder %s41, 0
      %s44 = sadd.s32 %s43, 1
      %s45 = scalar_select %p42, %s43, %s44
      %p48 = pneg %p42
      %p49 = scmp.eq.s32.totalorder %s21, 1
      %p50 = por %p48, %p49
      %p51 = scmp.ne.s32.totalorder %s43, %s46
      %p52 = scmp.eq.s32.totalorder %s21, 0
      %p53 = por %p51, %p52
      %p54 = scmp.ne.s32.totalorder %s43, %s46
      %p55 = scmp.eq.s32.totalorder %s26, 1
      %p56 = por %p54, %p55
      %p57 = scmp.ne.s32.totalorder %s46, %s47
      %p58 = scmp.eq.s32.totalorder %s26, 0
      %p59 = por %p57, %p58
      %p60 = scmp.ne.s32.totalorder %s46, %s47
      %p61 = scmp.eq.s32.totalorder %s27, 1
      %p62 = por %p60, %p61
      %p64 = scmp.ne.s32.totalorder %s47, %s63
      %p65 = scmp.eq.s32.totalorder %s27, 0
      %p66 = por %p64, %p65
      %s68 = sadd.s32 %s67, 1
      %p71 = scmp.eq.s32.totalorder %s21, 1
      %p72 = scmp.ne.s32.totalorder %s67, %s69
      %p73 = scmp.eq.s32.totalorder %s21, 0
      %p74 = por %p72, %p73
      %p75 = scmp.ne.s32.totalorder %s67, %s69
      %p76 = scmp.eq.s32.totalorder %s26, 1
      %p77 = por %p75, %p76
      %p78 = scmp.ne.s32.totalorder %s69, %s70
      %p79 = scmp.eq.s32.totalorder %s26, 0
      %p80 = por %p78, %p79
      %p81 = scmp.ne.s32.totalorder %s69, %s70
      %p82 = scmp.eq.s32.totalorder %s27, 1
      %p83 = por %p81, %p82
      %p85 = scmp.ne.s32.totalorder %s70, %s84
      %p86 = scmp.eq.s32.totalorder %s27, 0
      %p87 = por %p85, %p86
      %s89 = sadd.s32 %s88, 1
      %p92 = scmp.eq.s32.totalorder %s21, 1
      %p93 = scmp.ne.s32.totalorder %s88, %s90
      %p94 = scmp.eq.s32.totalorder %s21, 0
      %p95 = por %p93, %p94
      %p96 = scmp.ne.s32.totalorder %s88, %s90
      %p97 = scmp.eq.s32.totalorder %s26, 1
      %p98 = por %p96, %p97
      %p99 = scmp.ne.s32.totalorder %s90, %s91
      %p100 = scmp.eq.s32.totalorder %s26, 0
      %p101 = por %p99, %p100
      %p102 = scmp.ne.s32.totalorder %s90, %s91
      %p103 = scmp.eq.s32.totalorder %s27, 1
      %p104 = por %p102, %p103
      %p106 = scmp.ne.s32.totalorder %s91, %s105
      %p107 = scmp.eq.s32.totalorder %s27, 0
      %p108 = por %p106, %p107
      %s110 = sadd.s32 %s109, 1
      %p113 = scmp.eq.s32.totalorder %s21, 1
      %p114 = scmp.ne.s32.totalorder %s109, %s111
      %p115 = scmp.eq.s32.totalorder %s21, 0
      %p116 = por %p114, %p115
      %p117 = scmp.ne.s32.totalorder %s109, %s111
      %p118 = scmp.eq.s32.totalorder %s26, 1
      %p119 = por %p117, %p118
      %p120 = scmp.ne.s32.totalorder %s111, %s112
      %p121 = scmp.eq.s32.totalorder %s26, 0
      %p122 = por %p120, %p121
      %p123 = scmp.ne.s32.totalorder %s111, %s112
      %p124 = scmp.eq.s32.totalorder %s27, 1
      %p125 = por %p123, %p124
      %p127 = scmp.ne.s32.totalorder %s112, %s126
      %p128 = scmp.eq.s32.totalorder %s27, 0
      %p129 = por %p127, %p128
      %s131 = sadd.s32 %s130, 1
      %p134 = scmp.eq.s32.totalorder %s21, 1
      %p135 = scmp.ne.s32.totalorder %s130, %s132
      %p136 = scmp.eq.s32.totalorder %s21, 0
      %p137 = por %p135, %p136
      %p138 = scmp.ne.s32.totalorder %s130, %s132
      %p139 = scmp.eq.s32.totalorder %s26, 1
      %p140 = por %p138, %p139
      %p141 = scmp.ne.s32.totalorder %s132, %s133
      %p142 = scmp.eq.s32.totalorder %s26, 0
      %p143 = por %p141, %p142
      %p144 = scmp.ne.s32.totalorder %s132, %s133
      %p145 = scmp.eq.s32.totalorder %s27, 1
      %p146 = por %p144, %p145
      %p148 = scmp.ne.s32.totalorder %s133, %s147
      %p149 = scmp.eq.s32.totalorder %s27, 0
      %p150 = por %p148, %p149
      %s152 = sadd.s32 %s151, 1
      %p155 = scmp.eq.s32.totalorder %s21, 1
      %p156 = scmp.ne.s32.totalorder %s151, %s153
      %p157 = scmp.eq.s32.totalorder %s21, 0
      %p158 = por %p156, %p157
      %p159 = scmp.ne.s32.totalorder %s151, %s153
      %p160 = scmp.eq.s32.totalorder %s26, 1
      %p161 = por %p159, %p160
      %p162 = scmp.ne.s32.totalorder %s153, %s154
      %p163 = scmp.eq.s32.totalorder %s26, 0
      %p164 = por %p162, %p163
      %p165 = scmp.ne.s32.totalorder %s153, %s154
      %p166 = scmp.eq.s32.totalorder %s27, 1
      %p167 = por %p165, %p166
      %p169 = scmp.ne.s32.totalorder %s154, %s168
      %p170 = scmp.eq.s32.totalorder %s27, 0
      %p171 = por %p169, %p170
      %s173 = sadd.s32 %s172, 1
      %p176 = scmp.eq.s32.totalorder %s21, 1
      %p177 = scmp.ne.s32.totalorder %s172, %s174
      %p178 = scmp.eq.s32.totalorder %s21, 0
      %p179 = por %p177, %p178
      %p180 = scmp.ne.s32.totalorder %s172, %s174
      %p181 = scmp.eq.s32.totalorder %s26, 1
      %p182 = por %p180, %p181
      %p183 = scmp.ne.s32.totalorder %s174, %s175
      %p184 = scmp.eq.s32.totalorder %s26, 0
      %p185 = por %p183, %p184
      %p186 = scmp.ne.s32.totalorder %s174, %s175
      %p187 = scmp.eq.s32.totalorder %s27, 1
      %p188 = por %p186, %p187
      %p190 = scmp.ne.s32.totalorder %s175, %s189
      %p191 = scmp.eq.s32.totalorder %s27, 0
      %p192 = por %p190, %p191
      %s193 = ssub.s32 %s28, %s40
      %s194 = ssub.s32 %s29, %s36
      %s195 = sor.u32 %s193, %s194
      %p196 = scmp.eq.s32.totalorder %s195, 0
      %s198 = sadd.s32 %s197, 1
      %s199 = scalar_select %p196, %s197, %s198
      %p202 = pneg %p196
      %p203 = scmp.eq.s32.totalorder %s21, 1
      %p204 = por %p202, %p203
      %p205 = scmp.ne.s32.totalorder %s197, %s200
      %p206 = scmp.eq.s32.totalorder %s21, 0
      %p207 = por %p205, %p206
      %p208 = scmp.ne.s32.totalorder %s197, %s200
      %p209 = scmp.eq.s32.totalorder %s26, 1
      %p210 = por %p208, %p209
      %p211 = scmp.ne.s32.totalorder %s200, %s201
      %p212 = scmp.eq.s32.totalorder %s26, 0
      %p213 = por %p211, %p212
      %p214 = scmp.ne.s32.totalorder %s200, %s201
      %p215 = scmp.eq.s32.totalorder %s27, 1
      %p216 = por %p214, %p215
      %p218 = scmp.ne.s32.totalorder %s201, %s217
      %p219 = scmp.eq.s32.totalorder %s27, 0
      %p220 = por %p218, %p219
      %p221 = scmp.le.s32.totalorder 1, %s21
      %p222 = scmp.lt.s32.totalorder %s21, 3
      %p223 = pnand %p221, %p222
      %p224 = pneg %p223
      // Predicated region
      $region9: #{tpu_custom_call.1} parent=5 // pred_check
        _
      $region10: #{tpu_custom_call.1} parent=5 // pred_check_branch
        %226 = sbr.rel (%p223) target = $region12
      $region11: #{tpu_custom_call.1} parent=5 // pred_region
        %s227 = ssub.s32 %s21, 1
        // Predicated region
        $region13: #{tpu_custom_call.1} parent=11 // pred_check
          %p228 = pneg %p80
        $region14: #{tpu_custom_call.1} parent=11 // pred_check_branch
          %230 = sbr.rel (%p228) target = $region16
        $region15: #{tpu_custom_call.1} parent=11 // pred_region
          %232 = vsyncadd [#allocation8], 0
          %s233 = sshll.u32 %s1, 4
          %s234 = int_to_ptr.hbm [resolvable:$true] %s233
          %s235 = sshll.u32 [#allocation7], 4
          %s236 = int_to_ptr.vmem [resolvable:$true] %s235
          %241 = dma.hbm_to_vmem [thread:$0]  %s234, 512, %s236, [#allocation8], 128, 128, 8
        $region16: #{tpu_custom_call.1} parent=11 // pred_fallthru
          _
        // Predicated region
        $region17: #{tpu_custom_call.1} parent=11 // pred_check
          %p242 = pneg %p101
        $region18: #{tpu_custom_call.1} parent=11 // pred_check_branch
          %244 = sbr.rel (%p242) target = $region20
        $region19: #{tpu_custom_call.1} parent=11 // pred_region
          _
        $region20: #{tpu_custom_call.1} parent=11 // pred_fallthru
          _
        // Predicated region
        $region21: #{tpu_custom_call.1} parent=11 // pred_check
          %p245 = pneg %p122
        $region22: #{tpu_custom_call.1} parent=11 // pred_check_branch
          %247 = sbr.rel (%p245) target = $region24
        $region23: #{tpu_custom_call.1} parent=11 // pred_region
          %249 = vsyncadd [#allocation8], 0
          %s250 = sshll.u32 %s3, 4
          %s251 = int_to_ptr.hbm [resolvable:$true] %s250
          %s252 = sshll.u32 [#allocation9], 4
          %s253 = int_to_ptr.vmem [resolvable:$true] %s252
          %258 = dma.hbm_to_vmem [thread:$0]  %s251, 512, %s253, [#allocation8], 128, 128, 8
        $region24: #{tpu_custom_call.1} parent=11 // pred_fallthru
          _
        // Predicated region
        $region25: #{tpu_custom_call.1} parent=11 // pred_check
          %p259 = pneg %p143
        $region26: #{tpu_custom_call.1} parent=11 // pred_check_branch
          %261 = sbr.rel (%p259) target = $region28
        $region27: #{tpu_custom_call.1} parent=11 // pred_region
          _
        $region28: #{tpu_custom_call.1} parent=11 // pred_fallthru
          _
        // Predicated region
        $region29: #{tpu_custom_call.1} parent=11 // pred_check
          %p262 = pneg %p164
        $region30: #{tpu_custom_call.1} parent=11 // pred_check_branch
          %264 = sbr.rel (%p262) target = $region32
        $region31: #{tpu_custom_call.1} parent=11 // pred_region
          %266 = vsyncadd [#allocation11], 0
          %s267 = sshll.u32 %s5, 4
          %s268 = int_to_ptr.hbm [resolvable:$true] %s267
          %s269 = sshll.u32 [#allocation10], 4
          %s270 = int_to_ptr.vmem [resolvable:$true] %s269
          %275 = dma.hbm_to_vmem [thread:$0]  %s268, 512, %s270, [#allocation11], 128, 128, 8
        $region32: #{tpu_custom_call.1} parent=11 // pred_fallthru
          _
        // Predicated region
        $region33: #{tpu_custom_call.1} parent=11 // pred_check
          %p276 = pneg %p185
        $region34: #{tpu_custom_call.1} parent=11 // pred_check_branch
          %278 = sbr.rel (%p276) target = $region36
        $region35: #{tpu_custom_call.1} parent=11 // pred_region
          _
        $region36: #{tpu_custom_call.1} parent=11 // pred_fallthru
          _
      $region12: #{tpu_custom_call.1} parent=5 // pred_fallthru
        _
      %p279 = scmp.lt.s32.totalorder %s21, 2
      // Predicated region
      $region37: #{tpu_custom_call.1} parent=5 // pred_check
        %p280 = pneg %p279
      $region38: #{tpu_custom_call.1} parent=5 // pred_check_branch
        %282 = sbr.rel (%p280) target = $region40
      $region39: #{tpu_custom_call.1} parent=5 // pred_region
        // Predicated region
        $region41: #{tpu_custom_call.1} parent=39 // pred_check
          %p283 = pneg %p53
        $region42: #{tpu_custom_call.1} parent=39 // pred_check_branch
          %285 = sbr.rel (%p283) target = $region44
        $region43: #{tpu_custom_call.1} parent=39 // pred_region
          %s286 = sand.u32 %s43, 1
          %s287 = scalar_lea.sflag [#allocation5], %s286
          %s288 = sand.u32 %s43, 1
          %s289 = smul.addr %s288, 8
          %s290 = scalar_lea.vmem [#allocation4], %s289
          %292 = vsyncadd %s287, 0
          %s293 = smul.addr %s28, 8
          %s294 = scalar_lea.hbm %s0, %s293
          %s296 = sshll.u32 %s294, 4
          %s297 = int_to_ptr.hbm [resolvable:$true] %s296
          %s298 = sshll.u32 %s290, 4
          %s299 = int_to_ptr.vmem [resolvable:$true] %s298
          %301 = dma.hbm_to_vmem [thread:$0]  %s297, 128, %s299, %s287
        $region44: #{tpu_custom_call.1} parent=39 // pred_fallthru
          _
      $region40: #{tpu_custom_call.1} parent=5 // pred_fallthru
        _
      %p302 = scmp.le.s32.totalorder 1, %s21
      %p303 = scmp.lt.s32.totalorder %s21, 3
      %p304 = pnand %p302, %p303
      %p305 = pneg %p304
      // Predicated region
      $region45: #{tpu_custom_call.1} parent=5 // pred_check
        _
      $region46: #{tpu_custom_call.1} parent=5 // pred_check_branch
        %307 = sbr.rel (%p304) target = $region48
      $region47: #{tpu_custom_call.1} parent=5 // pred_region
        %s308 = ssub.s32 %s21, 1
        %s309 = sand.u32 %s46, 1
        %s310 = scalar_lea.sflag [#allocation5], %s309
        %s311 = sand.u32 %s46, 1
        %s312 = smul.addr %s311, 8
        %s313 = scalar_lea.vmem [#allocation4], %s312
        // Predicated region
        $region49: #{tpu_custom_call.1} parent=47 // pred_check
          %p314 = pneg %p59
        $region50: #{tpu_custom_call.1} parent=47 // pred_check_branch
          %316 = sbr.rel (%p314) target = $region52
        $region51: #{tpu_custom_call.1} parent=47 // pred_region
          %318 = dma.done %s310, 128
        $region52: #{tpu_custom_call.1} parent=47 // pred_fallthru
          _
        // Predicated region
        $region53: #{tpu_custom_call.1} parent=47 // pred_check
          %p319 = pneg %p80
        $region54: #{tpu_custom_call.1} parent=47 // pred_check_branch
          %321 = sbr.rel (%p319) target = $region56
        $region55: #{tpu_custom_call.1} parent=47 // pred_region
          %323 = dma.done [#allocation8], 512
        $region56: #{tpu_custom_call.1} parent=47 // pred_fallthru
          _
        // Predicated region
        $region57: #{tpu_custom_call.1} parent=47 // pred_check
          %p324 = pneg %p122
        $region58: #{tpu_custom_call.1} parent=47 // pred_check_branch
          %326 = sbr.rel (%p324) target = $region60
        $region59: #{tpu_custom_call.1} parent=47 // pred_region
          %328 = dma.done [#allocation8], 512
        $region60: #{tpu_custom_call.1} parent=47 // pred_fallthru
          _
        // Predicated region
        $region61: #{tpu_custom_call.1} parent=47 // pred_check
          %p329 = pneg %p164
        $region62: #{tpu_custom_call.1} parent=47 // pred_check_branch
          %331 = sbr.rel (%p329) target = $region64
        $region63: #{tpu_custom_call.1} parent=47 // pred_region
          %333 = dma.done [#allocation11], 512
        $region64: #{tpu_custom_call.1} parent=47 // pred_fallthru
          _
        %s334 = sand.u32 %s46, 1
        %s335 = scalar_lea.sflag [#allocation5], %s334
        %s336 = sand.u32 %s46, 1
        %s337 = smul.addr %s336, 8
        %s338 = scalar_lea.vmem [#allocation4], %s337
        %p339 = pneg %p59
        %p340 = pneg %p56
        %p341 = pneg %p80
        %p342 = pneg %p77
        %p343 = pneg %p101
        %p344 = pneg %p98
        %p345 = pneg %p122
        %p346 = pneg %p119
        %p347 = pneg %p143
        %p348 = pneg %p140
        %p349 = pneg %p164
        %p350 = pneg %p161
        %p351 = pneg %p185
        %p352 = pneg %p182
        %p353 = pneg %p213
        %p354 = pneg %p210
        %s355 = sand.u32 %s200, 1
        %s356 = scalar_lea.sflag [#allocation6], %s355
        %s357 = sand.u32 %s200, 1
        %s358 = smul.addr %s357, 8
        %s359 = scalar_lea.vmem [#allocation12], %s358
        %p360 = scmp.eq.s32.totalorder %s31, 0
        // Predicated region
        $region65: #{tpu_custom_call.1} parent=47 // pred_check
          %p361 = pneg %p360
        $region66: #{tpu_custom_call.1} parent=47 // pred_check_branch
          %363 = sbr.rel (%p361) target = $region68
        $region67: #{tpu_custom_call.1} parent=47 // pred_region
          %v364 = vld [vmem:[%s313] sm:$0xff]
          %v365 = vld [vmem:[#allocation9] sm:$0xff]
          %v366 = vld [vmem:[#allocation9 + $0x8] sm:$0xff]
          %v367 = vld [vmem:[#allocation9 + $0x10] sm:$0xff]
          %v368 = vld [vmem:[#allocation9 + $0x18] sm:$0xff]
          %v369 = vld [vmem:[%s4] sm:$0x1]
          %v371 = vperm.slane %v369, 0
          %vm373 = vcmask 261120
          %v375 = vsel %vm373, %v364, 0
          %377 = vmatpush.msra.mxu0 0.0
          %378 = vmatpush.msra.mxu0 0.0
          %379 = vmatpush.msra.mxu0 0.0
          %380 = vmatpush.msra.mxu0 0.0
          %381 = vmatpush.msra.mxu0 0.0
          %382 = vmatpush.msra.mxu0 0.0
          %383 = vmatpush.msra.mxu0 0.0
          %384 = vmatpush.msra.mxu0 0.0
          %385 = vmatpush.msra.mxu0 0.0
          %386 = vmatpush.msra.mxu0 0.0
          %387 = vmatpush.msra.mxu0 0.0
          %388 = vmatpush.msra.mxu0 0.0
          %389 = vmatpush.msra.mxu0 %v368
          %390 = vmatpush.msra.mxu0 %v367
          %391 = vmatpush.msra.mxu0 %v366
          %392 = vmatpush.msra.mxu0 %v365
          %393 = vmatmul.f32.gmra.mxu0 %v375
          %v394 = vpop.f32.mrf.mxu0
          %v395 = vadd.f32 %v371, %v394
          %396 = vdwg.mxu0
          %vm397 = vcmask 64512
          %398 = vst.msk [vmem:[#allocation2] sm:$0xff] %vm397, %v395
          %400 = vrot.lane.b32.xlu0 %v395, 120
          %v401 = vpop.permute.xlu0 %400
          %s403 = scalar_lea.vmem [#allocation2], 8
          %404 = vst.msk [vmem:[%s403] sm:$0xff] %vm397, %v401
          %405 = vrot.lane.b32.xlu0 %v395, 112
          %v406 = vpop.permute.xlu0 %405
          %s408 = scalar_lea.vmem [#allocation2], 16
          %409 = vst.msk [vmem:[%s408] sm:$0xff] %vm397, %v406
          %410 = vrot.lane.b32.xlu0 %v395, 104
          %v411 = vpop.permute.xlu0 %410
          %s413 = scalar_lea.vmem [#allocation2], 24
          %414 = vst.msk [vmem:[%s413] sm:$0xff] %vm397, %v411
          %415 = vrot.lane.b32.xlu0 %v395, 96
          %v416 = vpop.permute.xlu0 %415
          %s418 = scalar_lea.vmem [#allocation2], 32
          %419 = vst.msk [vmem:[%s418] sm:$0xff] %vm397, %v416
          %420 = vrot.lane.b32.xlu0 %v395, 88
          %v421 = vpop.permute.xlu0 %420
          %s423 = scalar_lea.vmem [#allocation2], 40
          %424 = vst.msk [vmem:[%s423] sm:$0xff] %vm397, %v421
          %425 = vrot.lane.b32.xlu0 %v395, 80
          %v426 = vpop.permute.xlu0 %425
          %s428 = scalar_lea.vmem [#allocation2], 48
          %429 = vst.msk [vmem:[%s428] sm:$0xff] %vm397, %v426
          %430 = vrot.lane.b32.xlu0 %v395, 72
          %v431 = vpop.permute.xlu0 %430
          %s433 = scalar_lea.vmem [#allocation2], 56
          %434 = vst.msk [vmem:[%s433] sm:$0xff] %vm397, %v431
        $region68: #{tpu_custom_call.1} parent=47 // pred_fallthru
          _
        %s435 = smul.u32 %s31, 8
        %s436 = scalar_lea.vmem %s313, %s435 [#allocation4]
        %v437 = vld [vmem:[%s436] sm:$0xff]
        %v438 = vld [vmem:[#allocation7] sm:$0xff]
        %v439 = vld [vmem:[#allocation7 + $0x8] sm:$0xff]
        %v440 = vld [vmem:[#allocation7 + $0x10] sm:$0xff]
        %v441 = vld [vmem:[#allocation7 + $0x18] sm:$0xff]
        %v442 = vld [vmem:[%s2] sm:$0x1]
        %v444 = vperm.slane %v442, 0
        %vm446 = vcmask 261120
        %v448 = vsel %vm446, %v437, 0
        %450 = vmatpush.msra.mxu0 0.0
        %451 = vmatpush.msra.mxu0 0.0
        %452 = vmatpush.msra.mxu0 0.0
        %453 = vmatpush.msra.mxu0 0.0
        %454 = vmatpush.msra.mxu0 0.0
        %455 = vmatpush.msra.mxu0 0.0
        %456 = vmatpush.msra.mxu0 0.0
        %457 = vmatpush.msra.mxu0 0.0
        %458 = vmatpush.msra.mxu0 0.0
        %459 = vmatpush.msra.mxu0 0.0
        %460 = vmatpush.msra.mxu0 0.0
        %461 = vmatpush.msra.mxu0 0.0
        %462 = vmatpush.msra.mxu0 %v441
        %463 = vmatpush.msra.mxu0 %v440
        %464 = vmatpush.msra.mxu0 %v439
        %465 = vmatpush.msra.mxu0 %v438
        %466 = vmatmul.f32.gmra.mxu0 %v448
        %v467 = vpop.f32.mrf.mxu0
        %v468 = vadd.f32 %v444, %v467
        %469 = vdwg.mxu0
        %vm470 = vcmask 64512
        %471 = vst.msk [vmem:[#allocation3] sm:$0xff] %vm470, %v468
        %473 = vrot.lane.b32.xlu0 %v468, 120
        %v474 = vpop.permute.xlu0 %473
        %s476 = scalar_lea.vmem [#allocation3], 8
        %477 = vst.msk [vmem:[%s476] sm:$0xff] %vm470, %v474
        %478 = vrot.lane.b32.xlu0 %v468, 112
        %v479 = vpop.permute.xlu0 %478
        %s481 = scalar_lea.vmem [#allocation3], 16
        %482 = vst.msk [vmem:[%s481] sm:$0xff] %vm470, %v479
        %483 = vrot.lane.b32.xlu0 %v468, 104
        %v484 = vpop.permute.xlu0 %483
        %s486 = scalar_lea.vmem [#allocation3], 24
        %487 = vst.msk [vmem:[%s486] sm:$0xff] %vm470, %v484
        %v488 = vld [vmem:[#allocation3] sm:$0xff]
        %v489 = vld [vmem:[#allocation3 + $0x8] sm:$0xff]
        %v490 = vld [vmem:[#allocation3 + $0x10] sm:$0xff]
        %v491 = vld [vmem:[#allocation3 + $0x18] sm:$0xff]
        %v492 = vld [vmem:[#allocation2] sm:$0xff]
        %v493 = vld [vmem:[#allocation2 + $0x8] sm:$0xff]
        %v494 = vld [vmem:[#allocation2 + $0x10] sm:$0xff]
        %v495 = vld [vmem:[#allocation2 + $0x18] sm:$0xff]
        %s496 = scalar_lea.vmem [#allocation2], 32
        %v497 = vld [vmem:[%s496] sm:$0xff]
        %v498 = vld [vmem:[%s496 + $0x8] sm:$0xff]
        %v499 = vld [vmem:[%s496 + $0x10] sm:$0xff]
        %v500 = vld [vmem:[%s496 + $0x18] sm:$0xff]
        %v502 = vsel %vm470, %v488, 0
        %v505 = vsel %vm470, %v492, 0
        %507 = vmatpush.xpose.msra.mxu0 0.0
        %508 = vmatpush.xpose.msra.mxu0 0.0
        %509 = vmatpush.xpose.msra.mxu0 0.0
        %510 = vmatpush.xpose.msra.mxu0 0.0
        %511 = vmatpush.xpose.msra.mxu0 0.0
        %512 = vmatpush.xpose.msra.mxu0 0.0
        %513 = vmatpush.xpose.msra.mxu0 0.0
        %514 = vmatpush.xpose.msra.mxu0 0.0
        %515 = vmatpush.xpose.msra.mxu0 0.0
        %516 = vmatpush.xpose.msra.mxu0 0.0
        %517 = vmatpush.xpose.msra.mxu0 0.0
        %518 = vmatpush.xpose.msra.mxu0 0.0
        %519 = vmatpush.xpose.msra.mxu0 0.0
        %520 = vmatpush.xpose.msra.mxu0 0.0
        %521 = vmatpush.xpose.msra.mxu0 0.0
        %522 = vmatpush.xpose.msra.mxu0 %v505
        %523 = vmatmul.f32.gmra.mxu0 %v502
        %v524 = vpop.f32.mrf.mxu0
        %v525 = vadd.f32 0.0, %v524
        %526 = vdwg.mxu0
        %v528 = vsel %vm470, %v489, 0
        %v531 = vsel %vm470, %v493, 0
        %533 = vmatpush.xpose.msra.mxu0 0.0
        %534 = vmatpush.xpose.msra.mxu0 0.0
        %535 = vmatpush.xpose.msra.mxu0 0.0
        %536 = vmatpush.xpose.msra.mxu0 0.0
        %537 = vmatpush.xpose.msra.mxu0 0.0
        %538 = vmatpush.xpose.msra.mxu0 0.0
        %539 = vmatpush.xpose.msra.mxu0 0.0
        %540 = vmatpush.xpose.msra.mxu0 0.0
        %541 = vmatpush.xpose.msra.mxu0 0.0
        %542 = vmatpush.xpose.msra.mxu0 0.0
        %543 = vmatpush.xpose.msra.mxu0 0.0
        %544 = vmatpush.xpose.msra.mxu0 0.0
        %545 = vmatpush.xpose.msra.mxu0 0.0
        %546 = vmatpush.xpose.msra.mxu0 0.0
        %547 = vmatpush.xpose.msra.mxu0 0.0
        %548 = vmatpush.xpose.msra.mxu0 %v531
        %549 = vmatmul.f32.gmra.mxu0 %v528
        %v550 = vpop.f32.mrf.mxu0
        %v551 = vadd.f32 0.0, %v550
        %552 = vdwg.mxu0
        %v554 = vsel %vm470, %v490, 0
        %v557 = vsel %vm470, %v494, 0
        %559 = vmatpush.xpose.msra.mxu0 0.0
        %560 = vmatpush.xpose.msra.mxu0 0.0
        %561 = vmatpush.xpose.msra.mxu0 0.0
        %562 = vmatpush.xpose.msra.mxu0 0.0
        %563 = vmatpush.xpose.msra.mxu0 0.0
        %564 = vmatpush.xpose.msra.mxu0 0.0
        %565 = vmatpush.xpose.msra.mxu0 0.0
        %566 = vmatpush.xpose.msra.mxu0 0.0
        %567 = vmatpush.xpose.msra.mxu0 0.0
        %568 = vmatpush.xpose.msra.mxu0 0.0
        %569 = vmatpush.xpose.msra.mxu0 0.0
        %570 = vmatpush.xpose.msra.mxu0 0.0
        %571 = vmatpush.xpose.msra.mxu0 0.0
        %572 = vmatpush.xpose.msra.mxu0 0.0
        %573 = vmatpush.xpose.msra.mxu0 0.0
        %574 = vmatpush.xpose.msra.mxu0 %v557
        %575 = vmatmul.f32.gmra.mxu0 %v554
        %v576 = vpop.f32.mrf.mxu0
        %v577 = vadd.f32 0.0, %v576
        %578 = vdwg.mxu0
        %v580 = vsel %vm470, %v491, 0
        %v583 = vsel %vm470, %v495, 0
        %585 = vmatpush.xpose.msra.mxu0 0.0
        %586 = vmatpush.xpose.msra.mxu0 0.0
        %587 = vmatpush.xpose.msra.mxu0 0.0
        %588 = vmatpush.xpose.msra.mxu0 0.0
        %589 = vmatpush.xpose.msra.mxu0 0.0
        %590 = vmatpush.xpose.msra.mxu0 0.0
        %591 = vmatpush.xpose.msra.mxu0 0.0
        %592 = vmatpush.xpose.msra.mxu0 0.0
        %593 = vmatpush.xpose.msra.mxu0 0.0
        %594 = vmatpush.xpose.msra.mxu0 0.0
        %595 = vmatpush.xpose.msra.mxu0 0.0
        %596 = vmatpush.xpose.msra.mxu0 0.0
        %597 = vmatpush.xpose.msra.mxu0 0.0
        %598 = vmatpush.xpose.msra.mxu0 0.0
        %599 = vmatpush.xpose.msra.mxu0 0.0
        %600 = vmatpush.xpose.msra.mxu0 %v583
        %601 = vmatmul.f32.gmra.mxu0 %v580
        %v602 = vpop.f32.mrf.mxu0
        %v603 = vadd.f32 0.0, %v602
        %604 = vdwg.mxu0
        %v605 = vsel %vm470, %v525, -inf
        %606 = vmax.xlane.f32.xlu0 %v605
        %v607 = vpop.xlane.xlu0 %606
        %v608 = vsel %vm470, %v551, -inf
        %609 = vmax.xlane.f32.xlu0 %v608
        %v610 = vpop.xlane.xlu0 %609
        %v611 = vsel %vm470, %v577, -inf
        %612 = vmax.xlane.f32.xlu0 %v611
        %v613 = vpop.xlane.xlu0 %612
        %v614 = vsel %vm470, %v603, -inf
        %615 = vmax.xlane.f32.xlu0 %v614
        %v616 = vpop.xlane.xlu0 %615
        %v617 = vsub.f32 %v525, %v607
        %v618 = vsub.f32 %v551, %v610
        %v619 = vsub.f32 %v577, %v613
        %v620 = vsub.f32 %v603, %v616
        %v621 = vmul.f32 %v617, 1.442695
        %v622 = vpow.pop %v621
        %v623 = vmul.f32 %v618, 1.442695
        %v624 = vpow.pop %v623
        %v625 = vmul.f32 %v619, 1.442695
        %v626 = vpow.pop %v625
        %v627 = vmul.f32 %v620, 1.442695
        %v628 = vpow.pop %v627
        %v629 = vsel %vm470, %v622, 0.0
        %630 = vadd.xlane.f32.xlu0 %v629
        %v631 = vpop.xlane.xlu0 %630
        %v632 = vsel %vm470, %v624, 0.0
        %633 = vadd.xlane.f32.xlu0 %v632
        %v634 = vpop.xlane.xlu0 %633
        %v635 = vsel %vm470, %v626, 0.0
        %636 = vadd.xlane.f32.xlu0 %v635
        %v637 = vpop.xlane.xlu0 %636
        %v638 = vsel %vm470, %v628, 0.0
        %639 = vadd.xlane.f32.xlu0 %v638
        %v640 = vpop.xlane.xlu0 %639
        %v642 = vsel %vm470, %v622, 0
        %644 = vmatpush.msra.mxu0 0.0
        %645 = vmatpush.msra.mxu0 0.0
        %646 = vmatpush.msra.mxu0 0.0
        %647 = vmatpush.msra.mxu0 0.0
        %648 = vmatpush.msra.mxu0 0.0
        %649 = vmatpush.msra.mxu0 0.0
        %650 = vmatpush.msra.mxu0 0.0
        %651 = vmatpush.msra.mxu0 0.0
        %652 = vmatpush.msra.mxu0 0.0
        %653 = vmatpush.msra.mxu0 0.0
        %654 = vmatpush.msra.mxu0 0.0
        %655 = vmatpush.msra.mxu0 0.0
        %656 = vmatpush.msra.mxu0 0.0
        %657 = vmatpush.msra.mxu0 0.0
        %658 = vmatpush.msra.mxu0 0.0
        %659 = vmatpush.msra.mxu0 %v497
        %660 = vmatmul.f32.gmra.mxu0 %v642
        %v661 = vpop.f32.mrf.mxu0
        %v662 = vadd.f32 0.0, %v661
        %663 = vdwg.mxu0
        %v665 = vsel %vm470, %v624, 0
        %667 = vmatpush.msra.mxu0 0.0
        %668 = vmatpush.msra.mxu0 0.0
        %669 = vmatpush.msra.mxu0 0.0
        %670 = vmatpush.msra.mxu0 0.0
        %671 = vmatpush.msra.mxu0 0.0
        %672 = vmatpush.msra.mxu0 0.0
        %673 = vmatpush.msra.mxu0 0.0
        %674 = vmatpush.msra.mxu0 0.0
        %675 = vmatpush.msra.mxu0 0.0
        %676 = vmatpush.msra.mxu0 0.0
        %677 = vmatpush.msra.mxu0 0.0
        %678 = vmatpush.msra.mxu0 0.0
        %679 = vmatpush.msra.mxu0 0.0
        %680 = vmatpush.msra.mxu0 0.0
        %681 = vmatpush.msra.mxu0 0.0
        %682 = vmatpush.msra.mxu0 %v498
        %683 = vmatmul.f32.gmra.mxu0 %v665
        %v684 = vpop.f32.mrf.mxu0
        %v685 = vadd.f32 0.0, %v684
        %686 = vdwg.mxu0
        %v688 = vsel %vm470, %v626, 0
        %690 = vmatpush.msra.mxu0 0.0
        %691 = vmatpush.msra.mxu0 0.0
        %692 = vmatpush.msra.mxu0 0.0
        %693 = vmatpush.msra.mxu0 0.0
        %694 = vmatpush.msra.mxu0 0.0
        %695 = vmatpush.msra.mxu0 0.0
        %696 = vmatpush.msra.mxu0 0.0
        %697 = vmatpush.msra.mxu0 0.0
        %698 = vmatpush.msra.mxu0 0.0
        %699 = vmatpush.msra.mxu0 0.0
        %700 = vmatpush.msra.mxu0 0.0
        %701 = vmatpush.msra.mxu0 0.0
        %702 = vmatpush.msra.mxu0 0.0
        %703 = vmatpush.msra.mxu0 0.0
        %704 = vmatpush.msra.mxu0 0.0
        %705 = vmatpush.msra.mxu0 %v499
        %706 = vmatmul.f32.gmra.mxu0 %v688
        %v707 = vpop.f32.mrf.mxu0
        %v708 = vadd.f32 0.0, %v707
        %709 = vdwg.mxu0
        %v711 = vsel %vm470, %v628, 0
        %713 = vmatpush.msra.mxu0 0.0
        %714 = vmatpush.msra.mxu0 0.0
        %715 = vmatpush.msra.mxu0 0.0
        %716 = vmatpush.msra.mxu0 0.0
        %717 = vmatpush.msra.mxu0 0.0
        %718 = vmatpush.msra.mxu0 0.0
        %719 = vmatpush.msra.mxu0 0.0
        %720 = vmatpush.msra.mxu0 0.0
        %721 = vmatpush.msra.mxu0 0.0
        %722 = vmatpush.msra.mxu0 0.0
        %723 = vmatpush.msra.mxu0 0.0
        %724 = vmatpush.msra.mxu0 0.0
        %725 = vmatpush.msra.mxu0 0.0
        %726 = vmatpush.msra.mxu0 0.0
        %727 = vmatpush.msra.mxu0 0.0
        %728 = vmatpush.msra.mxu0 %v500
        %729 = vmatmul.f32.gmra.mxu0 %v711
        %v730 = vpop.f32.mrf.mxu0
        %v731 = vadd.f32 0.0, %v730
        %732 = vdwg.mxu0
        %v733 = vrcp.pop %v631
        %v734 = vmul.f32 %v631, %v733
        %v735 = vsub.f32 1.0, %v734
        %v736 = vmul.f32 %v733, %v735
        %v737 = vadd.f32 %v733, %v736
        %vm738 = vweird.f32 %v631
        %vm739 = vweird.f32 %v733
        %vm740 = vmor %vm738, %vm739
        %v741 = vsel %vm740, %v733, %v737
        %v742 = vand.u32 2147483647, %v631
        %vm743 = vcmp.eq.f32.partialorder %v742, 8.507059e+37
        %v744 = vand.u32 %v631, 2147483648
        %v745 = vor.u32 1.1754944e-38, %v744
        %v746 = vsel %vm743, %v745, %v741
        %v747 = vmul.f32 %v662, %v746
        %v748 = vrcp.pop %v634
        %v749 = vmul.f32 %v634, %v748
        %v750 = vsub.f32 1.0, %v749
        %v751 = vmul.f32 %v748, %v750
        %v752 = vadd.f32 %v748, %v751
        %vm753 = vweird.f32 %v634
        %vm754 = vweird.f32 %v748
        %vm755 = vmor %vm753, %vm754
        %v756 = vsel %vm755, %v748, %v752
        %v757 = vand.u32 2147483647, %v634
        %vm758 = vcmp.eq.f32.partialorder %v757, 8.507059e+37
        %v759 = vand.u32 %v634, 2147483648
        %v760 = vor.u32 1.1754944e-38, %v759
        %v761 = vsel %vm758, %v760, %v756
        %v762 = vmul.f32 %v685, %v761
        %v763 = vrcp.pop %v637
        %v764 = vmul.f32 %v637, %v763
        %v765 = vsub.f32 1.0, %v764
        %v766 = vmul.f32 %v763, %v765
        %v767 = vadd.f32 %v763, %v766
        %vm768 = vweird.f32 %v637
        %vm769 = vweird.f32 %v763
        %vm770 = vmor %vm768, %vm769
        %v771 = vsel %vm770, %v763, %v767
        %v772 = vand.u32 2147483647, %v637
        %vm773 = vcmp.eq.f32.partialorder %v772, 8.507059e+37
        %v774 = vand.u32 %v637, 2147483648
        %v775 = vor.u32 1.1754944e-38, %v774
        %v776 = vsel %vm773, %v775, %v771
        %v777 = vmul.f32 %v708, %v776
        %v778 = vrcp.pop %v640
        %v779 = vmul.f32 %v640, %v778
        %v780 = vsub.f32 1.0, %v779
        %v781 = vmul.f32 %v778, %v780
        %v782 = vadd.f32 %v778, %v781
        %vm783 = vweird.f32 %v640
        %vm784 = vweird.f32 %v778
        %vm785 = vmor %vm783, %vm784
        %v786 = vsel %vm785, %v778, %v782
        %v787 = vand.u32 2147483647, %v640
        %vm788 = vcmp.eq.f32.partialorder %v787, 8.507059e+37
        %v789 = vand.u32 %v640, 2147483648
        %v790 = vor.u32 1.1754944e-38, %v789
        %v791 = vsel %vm788, %v790, %v786
        %v792 = vmul.f32 %v731, %v791
        %v793 = vld [vmem:[#allocation10] sm:$0xff]
        %s794 = scalar_lea.vmem [#allocation10], 8
        %v795 = vld [vmem:[%s794] sm:$0xff]
        %v797 = vsel %vm470, %v762, 0
        %799 = vmatpush.msra.mxu0 0.0
        %800 = vmatpush.msra.mxu0 0.0
        %801 = vmatpush.msra.mxu0 0.0
        %802 = vmatpush.msra.mxu0 0.0
        %803 = vmatpush.msra.mxu0 0.0
        %804 = vmatpush.msra.mxu0 0.0
        %805 = vmatpush.msra.mxu0 0.0
        %806 = vmatpush.msra.mxu0 0.0
        %807 = vmatpush.msra.mxu0 0.0
        %808 = vmatpush.msra.mxu0 0.0
        %809 = vmatpush.msra.mxu0 0.0
        %810 = vmatpush.msra.mxu0 0.0
        %811 = vmatpush.msra.mxu0 0.0
        %812 = vmatpush.msra.mxu0 0.0
        %813 = vmatpush.msra.mxu0 0.0
        %814 = vmatpush.msra.mxu0 %v795
        %815 = vmatmul.f32.gmra.mxu0 %v797
        %v816 = vpop.f32.mrf.mxu0
        %v817 = vadd.f32 0.0, %v816
        %818 = vdwg.mxu0
        %v820 = vsel %vm470, %v747, 0
        %822 = vmatpush.msra.mxu0 0.0
        %823 = vmatpush.msra.mxu0 0.0
        %824 = vmatpush.msra.mxu0 0.0
        %825 = vmatpush.msra.mxu0 0.0
        %826 = vmatpush.msra.mxu0 0.0
        %827 = vmatpush.msra.mxu0 0.0
        %828 = vmatpush.msra.mxu0 0.0
        %829 = vmatpush.msra.mxu0 0.0
        %830 = vmatpush.msra.mxu0 0.0
        %831 = vmatpush.msra.mxu0 0.0
        %832 = vmatpush.msra.mxu0 0.0
        %833 = vmatpush.msra.mxu0 0.0
        %834 = vmatpush.msra.mxu0 0.0
        %835 = vmatpush.msra.mxu0 0.0
        %836 = vmatpush.msra.mxu0 0.0
        %837 = vmatpush.msra.mxu0 %v793
        %838 = vmatmul.f32.gmra.mxu0 %v820
        %v839 = vpop.f32.mrf.mxu0
        %v840 = vadd.f32 %v817, %v839
        %841 = vdwg.mxu0
        %s842 = scalar_lea.vmem [#allocation10], 16
        %v843 = vld [vmem:[%s842] sm:$0xff]
        %v845 = vsel %vm470, %v777, 0
        %847 = vmatpush.msra.mxu0 0.0
        %848 = vmatpush.msra.mxu0 0.0
        %849 = vmatpush.msra.mxu0 0.0
        %850 = vmatpush.msra.mxu0 0.0
        %851 = vmatpush.msra.mxu0 0.0
        %852 = vmatpush.msra.mxu0 0.0
        %853 = vmatpush.msra.mxu0 0.0
        %854 = vmatpush.msra.mxu0 0.0
        %855 = vmatpush.msra.mxu0 0.0
        %856 = vmatpush.msra.mxu0 0.0
        %857 = vmatpush.msra.mxu0 0.0
        %858 = vmatpush.msra.mxu0 0.0
        %859 = vmatpush.msra.mxu0 0.0
        %860 = vmatpush.msra.mxu0 0.0
        %861 = vmatpush.msra.mxu0 0.0
        %862 = vmatpush.msra.mxu0 %v843
        %863 = vmatmul.f32.gmra.mxu0 %v845
        %v864 = vpop.f32.mrf.mxu0
        %v865 = vadd.f32 0.0, %v864
        %866 = vdwg.mxu0
        %v867 = vadd.f32 %v840, %v865
        %s868 = scalar_lea.vmem [#allocation10], 24
        %v869 = vld [vmem:[%s868] sm:$0xff]
        %v871 = vsel %vm470, %v792, 0
        %873 = vmatpush.msra.mxu0 0.0
        %874 = vmatpush.msra.mxu0 0.0
        %875 = vmatpush.msra.mxu0 0.0
        %876 = vmatpush.msra.mxu0 0.0
        %877 = vmatpush.msra.mxu0 0.0
        %878 = vmatpush.msra.mxu0 0.0
        %879 = vmatpush.msra.mxu0 0.0
        %880 = vmatpush.msra.mxu0 0.0
        %881 = vmatpush.msra.mxu0 0.0
        %882 = vmatpush.msra.mxu0 0.0
        %883 = vmatpush.msra.mxu0 0.0
        %884 = vmatpush.msra.mxu0 0.0
        %885 = vmatpush.msra.mxu0 0.0
        %886 = vmatpush.msra.mxu0 0.0
        %887 = vmatpush.msra.mxu0 0.0
        %888 = vmatpush.msra.mxu0 %v869
        %889 = vmatmul.f32.gmra.mxu0 %v871
        %v890 = vpop.f32.mrf.mxu0
        %v891 = vadd.f32 0.0, %v890
        %892 = vdwg.mxu0
        %v893 = vadd.f32 %v867, %v891
        %v894 = vld [vmem:[%s6] sm:$0x1]
        %v896 = vperm.slane %v894, 0
        %v898 = vadd.f32 %v893, %v896
        %899 = vst.msk [vmem:[%s359] sm:$0xff] %vm446, %v898
        %s900 = sand.u32 %s200, 1
        %s901 = scalar_lea.sflag [#allocation6], %s900
        %s902 = sand.u32 %s200, 1
        %s903 = smul.addr %s902, 8
        %s904 = scalar_lea.vmem [#allocation12], %s903
        // Predicated region
        $region69: #{tpu_custom_call.1} parent=47 // pred_check
          %p905 = pneg %p210
        $region70: #{tpu_custom_call.1} parent=47 // pred_check_branch
          %907 = sbr.rel (%p905) target = $region72
        $region71: #{tpu_custom_call.1} parent=47 // pred_region
          %909 = vsyncadd %s901, 0
          %s910 = sadd.s32 %s31, %s30
          %s911 = smul.addr %s910, 8
          %s912 = scalar_lea.hbm %s7, %s911
          %s914 = sshll.u32 %s904, 4
          %s915 = int_to_ptr.vmem [resolvable:$true] %s914
          %s916 = sshll.u32 %s912, 4
          %s917 = int_to_ptr.hbm [resolvable:$true] %s916
          %919 = dma.vmem_to_hbm [thread:$0]  %s915, 128, %s917, %s901
        $region72: #{tpu_custom_call.1} parent=47 // pred_fallthru
          _
      $region48: #{tpu_custom_call.1} parent=5 // pred_fallthru
        _
      %p920 = scmp.le.s32.totalorder 2, %s21
      // Predicated region
      $region73: #{tpu_custom_call.1} parent=5 // pred_check
        %p921 = pneg %p920
      $region74: #{tpu_custom_call.1} parent=5 // pred_check_branch
        %923 = sbr.rel (%p921) target = $region76
      $region75: #{tpu_custom_call.1} parent=5 // pred_region
        %s924 = ssub.s32 %s21, 2
        // Predicated region
        $region77: #{tpu_custom_call.1} parent=75 // pred_check
          %p925 = pneg %p216
        $region78: #{tpu_custom_call.1} parent=75 // pred_check_branch
          %927 = sbr.rel (%p925) target = $region80
        $region79: #{tpu_custom_call.1} parent=75 // pred_region
          %s928 = sand.u32 %s201, 1
          %s929 = scalar_lea.sflag [#allocation6], %s928
          %s930 = sand.u32 %s201, 1
          %s931 = smul.addr %s930, 8
          %s932 = scalar_lea.vmem [#allocation12], %s931
          %934 = dma.done %s929, 128
        $region80: #{tpu_custom_call.1} parent=75 // pred_fallthru
          _
      $region76: #{tpu_custom_call.1} parent=5 // pred_fallthru
        _
    $region6: #{tpu_custom_call.1} parent=1 // loop_footer
      %s25 = sadd.s32 1, %s21
    $region7: #{tpu_custom_call.1} parent=1 // loop_footer_branch
      %20 = sbr.rel target = $region3
    $region8: #{tpu_custom_call.1} parent=1 // loop_exit
      _
    %935 = vsyncpa [#allocation5], 1
    %s936 = scalar_lea.sflag [#allocation5], 1
    %937 = vsyncpa %s936, 1
    %938 = vsyncpa [#allocation8], 1
    %939 = vsyncpa [#allocation11], 1
    %940 = vsyncpa [#allocation6], 1
    %s941 = scalar_lea.sflag [#allocation6], 1
    %942 = vsyncpa %s941, 1

</llo_original>
